<compile_context>
chip_gen: v7x
topology: tpu7x:2x2x1
jax: 0.10.0
libtpu: 0.0.40
codegen_flags: <defaults>
</compile_context>

<pallas_src>
import jax
import jax.numpy as jnp
from jax.experimental import pallas as pl
from jax.experimental.pallas import tpu as pltpu


def _round_up(v, m):
    return ((v + m - 1) // m) * m


def _linear_sigmoid_kernel(x_ref, w_ref, b_ref, o_ref):
    # x_ref: (TILE, W)  packed rows (W == 128 on the packed path, else F)
    # w_ref: (W, K)     block-diagonal weight ((F, 1) on the fallback path)
    # b_ref: (1,)       scalar bias in SMEM
    # o_ref: (TILE, K)  sigmoid(logit), one sample per element
    xb = x_ref[...].astype(jnp.bfloat16)   # VPU cast -> guaranteed single-pass MXU
    wb = w_ref[...].astype(jnp.bfloat16)
    z = jnp.dot(xb, wb, preferred_element_type=jnp.float32) + b_ref[0]
    # sigmoid via EUP exp + EUP reciprocal (exact reciprocal is still free here).
    o_ref[...] = pl.reciprocal(1.0 + jnp.exp(-z), approx=False).astype(o_ref.dtype)


def linear_sigmoid(x, w, b, w_block=None):
    """sigmoid(x @ w + b)[:, 0] via a row-tiled, lane-dense Pallas kernel.

    x: (N, F) f32; w: (F, 1) f32; b: (1,) f32 -> (N,) f32.
    """
    n, f = x.shape
    k = 128 // f if (f <= 128 and 128 % f == 0) else 1

    if k > 1 and n % k == 0:
        # Lane-dense packed path: free bitcast reshape, zero HBM copies.
        rows = n // k
        xp = x.reshape(rows, k * f)
        if w_block is None:
            w_block = jnp.kron(jnp.eye(k, dtype=x.dtype), w.reshape(f, 1))
    else:
        # TODO(synk): general F / ragged N use the unpacked (lane-sparse input)
        # path rather than paying a full HBM copy of x to repack it.
        k = 1
        rows = n
        xp = x
        w_block = w.reshape(f, 1)

    width = xp.shape[1]

    # Row tile: sublane-aligned, capped so the x block is ~2 MiB in VMEM
    # (4 MiB double-buffered), and split into >= 2 grid steps when possible so
    # both v7x TensorCores get work under dimension_semantics=("parallel",).
    lanes = _round_up(width, 128)                               # VMEM lane padding
    cap = max(8, ((2 * 1024 * 1024) // (lanes * 4)) // 8 * 8)
    tile = max(8, min(cap, _round_up(-(-rows // 2), 8)))
    grid = -(-rows // tile)          # ragged last tile handled by Pallas masking

    # TODO(synk): the (tile, k) output block lowers to masked stores; an
    # in-kernel (tile, k) -> (tile*k/128, 128) lane-dense reshape would remove
    # them, but output traffic is only 1/F of input traffic so it is kept simple.
    out = pl.pallas_call(
        _linear_sigmoid_kernel,
        out_shape=jax.ShapeDtypeStruct((rows, k), jnp.float32),
        grid_spec=pltpu.PrefetchScalarGridSpec(
            num_scalar_prefetch=0,
            grid=(grid,),
            in_specs=[
                pl.BlockSpec((tile, width), lambda i: (i, 0)),      # x row tiles
                pl.BlockSpec((width, k), lambda i: (0, 0)),         # weight (fetched once)
                pl.BlockSpec(memory_space=pltpu.MemorySpace.SMEM),  # scalar bias
            ],
            out_specs=pl.BlockSpec((tile, k), lambda i: (i, 0)),
        ),
        compiler_params=pltpu.CompilerParams(
            dimension_semantics=("parallel",),    # shards row tiles across v7x's 2 TCs
            vmem_limit_bytes=32 * 1024 * 1024,    # MiB-scale tiles OK on v5e too
        ),
    )(xp, w_block, b)

    # (rows, k) flattens row-major back to sample order; no padding to slice off.
    return out.reshape(n)


@jax.jit
def _forward(x_ind, x_org, w_ind, b_ind, wblk_ind, w_org, b_org, wblk_org):
    # Both heads under one jit: launch overhead amortized, DMAs overlap.
    # TODO(synk): for tiny N the two heads could be fused into one pallas_call
    # to halve the fixed launch/prologue cost.
    return (linear_sigmoid(x_ind, w_ind, b_ind, wblk_ind),
            linear_sigmoid(x_org, w_org, b_org, wblk_org))


class Logistic01:
    """JAX/Pallas port of logistic_01 (forward pass only)."""

    def __init__(self, num_features_ind, num_features_org,
                 num_features_ext, num_features_txn_edge, key):
        del num_features_ext, num_features_txn_edge  # unused by forward (as in PyTorch)
        k1, k2, k3, k4 = jax.random.split(key, 4)
        # Mimic PyTorch Linear default init: U(-1/sqrt(F), 1/sqrt(F)).
        bi = 1.0 / jnp.sqrt(jnp.float32(num_features_ind))
        bo = 1.0 / jnp.sqrt(jnp.float32(num_features_org))
        self.w_ind = jax.random.uniform(k1, (num_features_ind, 1), jnp.float32, -bi, bi)
        self.b_ind = jax.random.uniform(k2, (1,), jnp.float32, -bi, bi)
        self.w_org = jax.random.uniform(k3, (num_features_org, 1), jnp.float32, -bo, bo)
        self.b_org = jax.random.uniform(k4, (1,), jnp.float32, -bo, bo)
        # Precompute block-diagonal packed weights once (used when N % k == 0).
        self.wblk_ind = self._make_block(self.w_ind)
        self.wblk_org = self._make_block(self.w_org)

    @staticmethod
    def _make_block(w):
        f = w.shape[0]
        if f <= 128 and 128 % f == 0:
            return jnp.kron(jnp.eye(128 // f, dtype=w.dtype), w)
        return w

    def __call__(self, x_dict, edge_index_dict=None, edge_attr_dict=None):
        return _forward(x_dict['ind'], x_dict['org'],
                        self.w_ind, self.b_ind, self.wblk_ind,
                        self.w_org, self.b_org, self.wblk_org)


if __name__ == "__main__":
    key = jax.random.PRNGKey(0)
    k_model, k_ind, k_org = jax.random.split(key, 3)

    num_features_ind = 32
    num_features_org = 16
    num_features_ext = 8          # unused by forward (as in the PyTorch module)
    num_features_txn_edge = 4     # unused by forward

    # Non-multiples of the row tile: exercises the ragged-last-tile masking.
    n_ind, n_org = 300, 200
    x_dict = {
        'ind': jax.random.normal(k_ind, (n_ind, num_features_ind), jnp.float32),
        'org': jax.random.normal(k_org, (n_org, num_features_org), jnp.float32),
    }

    model = Logistic01(num_features_ind, num_features_org,
                       num_features_ext, num_features_txn_edge, k_model)

    pred_ind, pred_org = model(x_dict, {}, {})
    jax.block_until_ready(pred_ind)
    jax.block_until_ready(pred_org)

    # Reference check in plain JAX (f32).
    ref_ind = jax.nn.sigmoid(x_dict['ind'] @ model.w_ind[:, 0] + model.b_ind[0])
    ref_org = jax.nn.sigmoid(x_dict['org'] @ model.w_org[:, 0] + model.b_org[0])
    assert pred_ind.shape == (n_ind,) and pred_org.shape == (n_org,)
    # Kernel matmul truncates operands to bf16 (single-pass MXU) -> small slack.
    assert jnp.allclose(pred_ind, ref_ind, atol=5e-3, rtol=5e-3)
    assert jnp.allclose(pred_org, ref_org, atol=5e-3, rtol=5e-3)

    print("KERNEL_OK")
</pallas_src>

<mosaic_0001>
module attributes {stable_mosaic.version = 11 : i64} {
  func.func @_linear_sigmoid_kernel(%arg0: i32, %arg1: memref<40x128xf32, #tpu.memory_space<vmem>>, %arg2: memref<128x4xf32, #tpu.memory_space<vmem>>, %arg3: memref<1xf32, #tpu.memory_space<smem>>, %arg4: memref<40x4xf32, #tpu.memory_space<vmem>>) attributes {dimension_semantics = [#tpu.dimension_semantics<parallel>], iteration_bounds = array<i64: 2>, scalar_prefetch = 0 : i64, scratch_operands = 0 : i64, tpu.core_type = #tpu.core_type<tc>, window_params = [{transform_indices = @transform_0, window_bounds = array<i64: 40, 128>}, {pipeline_mode = #tpu.pipeline_mode<synchronous>, transform_indices = @transform_1, window_bounds = array<i64: 128, 4>}, {transform_indices = @transform_2, window_bounds = array<i64: 1>}, {transform_indices = @transform_3, window_bounds = array<i64: 40, 4>}]} {
    %c0 = arith.constant 0 : index
    %c0_0 = arith.constant 0 : index
    %0 = vector.load %arg1[%c0, %c0_0] : memref<40x128xf32, #tpu.memory_space<vmem>>, vector<40x128xf32>
    %1 = arith.truncf %0 : vector<40x128xf32> to vector<40x128xbf16>
    %c0_1 = arith.constant 0 : index
    %c0_2 = arith.constant 0 : index
    %2 = vector.load %arg2[%c0_1, %c0_2] : memref<128x4xf32, #tpu.memory_space<vmem>>, vector<128x4xf32>
    %3 = arith.truncf %2 : vector<128x4xf32> to vector<128x4xbf16>
    %cst = arith.constant dense<0.000000e+00> : vector<40x4xf32>
    %4 = tpu.matmul %1, %3, %cst {dimension_numbers = #tpu.dot_dimension_numbers<[1], [0], [0], [1], [0, 0, 1, 1], [], []>} : vector<40x128xbf16>, vector<128x4xbf16>, vector<40x4xf32> -> vector<40x4xf32>
    %c0_3 = arith.constant 0 : index
    %5 = memref.load %arg3[%c0_3] : memref<1xf32, #tpu.memory_space<smem>>
    %6 = vector.broadcast %5 : f32 to vector<40x4xf32>
    %7 = arith.addf %4, %6 : vector<40x4xf32>
    %cst_4 = arith.constant 0.000000e+00 : f32
    %8 = vector.broadcast %cst_4 : f32 to vector<40x4xf32>
    %9 = arith.subf %8, %7 : vector<40x4xf32>
    %10 = math.exp %9 : vector<40x4xf32>
    %cst_5 = arith.constant 1.000000e+00 : f32
    %11 = vector.broadcast %cst_5 : f32 to vector<40x4xf32>
    %12 = arith.addf %11, %10 : vector<40x4xf32>
    %13 = tpu.reciprocal %12 : vector<40x4xf32> -> vector<40x4xf32>
    %c0_6 = arith.constant 0 : index
    %c0_7 = arith.constant 0 : index
    %14 = vector.load %arg4[%c0_6, %c0_7] : memref<40x4xf32, #tpu.memory_space<vmem>>, vector<40x4xf32>
    tpu.vector_store %arg4[%c0_6, %c0_7], %13 {strides = array<i32>} : memref<40x4xf32, #tpu.memory_space<vmem>>, vector<40x4xf32>,
    return
  }
  func.func @transform_0(%arg0: i32) -> (i32, i32) {
    %c0_i32 = arith.constant 0 : i32
    %c0_i32_0 = arith.constant 0 : i32
    return %arg0, %c0_i32 : i32, i32
  }
  func.func @transform_1(%arg0: i32) -> (i32, i32) {
    %c0_i32 = arith.constant 0 : i32
    %c0_i32_0 = arith.constant 0 : i32
    %c0_i32_1 = arith.constant 0 : i32
    return %c0_i32, %c0_i32_0 : i32, i32
  }
  func.func @transform_2(%arg0: i32) -> i32 {
    %c0_i32 = arith.constant 0 : i32
    %c0_i32_0 = arith.constant 0 : i32
    return %c0_i32 : i32
  }
  func.func @transform_3(%arg0: i32) -> (i32, i32) {
    %c0_i32 = arith.constant 0 : i32
    %c0_i32_0 = arith.constant 0 : i32
    return %arg0, %c0_i32 : i32, i32
  }
}

module attributes {stable_mosaic.version = 11 : i64} {
  func.func @_linear_sigmoid_kernel(%arg0: i32, %arg1: memref<16x128xf32, #tpu.memory_space<vmem>>, %arg2: memref<128x8xf32, #tpu.memory_space<vmem>>, %arg3: memref<1xf32, #tpu.memory_space<smem>>, %arg4: memref<16x8xf32, #tpu.memory_space<vmem>>) attributes {dimension_semantics = [#tpu.dimension_semantics<parallel>], iteration_bounds = array<i64: 2>, scalar_prefetch = 0 : i64, scratch_operands = 0 : i64, tpu.core_type = #tpu.core_type<tc>, window_params = [{transform_indices = @transform_0, window_bounds = array<i64: 16, 128>}, {pipeline_mode = #tpu.pipeline_mode<synchronous>, transform_indices = @transform_1, window_bounds = array<i64: 128, 8>}, {transform_indices = @transform_2, window_bounds = array<i64: 1>}, {transform_indices = @transform_3, window_bounds = array<i64: 16, 8>}]} {
    %c0 = arith.constant 0 : index
    %c0_0 = arith.constant 0 : index
    %0 = vector.load %arg1[%c0, %c0_0] : memref<16x128xf32, #tpu.memory_space<vmem>>, vector<16x128xf32>
    %1 = arith.truncf %0 : vector<16x128xf32> to vector<16x128xbf16>
    %c0_1 = arith.constant 0 : index
    %c0_2 = arith.constant 0 : index
    %2 = vector.load %arg2[%c0_1, %c0_2] : memref<128x8xf32, #tpu.memory_space<vmem>>, vector<128x8xf32>
    %3 = arith.truncf %2 : vector<128x8xf32> to vector<128x8xbf16>
    %cst = arith.constant dense<0.000000e+00> : vector<16x8xf32>
    %4 = tpu.matmul %1, %3, %cst {dimension_numbers = #tpu.dot_dimension_numbers<[1], [0], [0], [1], [0, 0, 1, 1], [], []>} : vector<16x128xbf16>, vector<128x8xbf16>, vector<16x8xf32> -> vector<16x8xf32>
    %c0_3 = arith.constant 0 : index
    %5 = memref.load %arg3[%c0_3] : memref<1xf32, #tpu.memory_space<smem>>
    %6 = vector.broadcast %5 : f32 to vector<16x8xf32>
    %7 = arith.addf %4, %6 : vector<16x8xf32>
    %cst_4 = arith.constant 0.000000e+00 : f32
    %8 = vector.broadcast %cst_4 : f32 to vector<16x8xf32>
    %9 = arith.subf %8, %7 : vector<16x8xf32>
    %10 = math.exp %9 : vector<16x8xf32>
    %cst_5 = arith.constant 1.000000e+00 : f32
    %11 = vector.broadcast %cst_5 : f32 to vector<16x8xf32>
    %12 = arith.addf %11, %10 : vector<16x8xf32>
    %13 = tpu.reciprocal %12 : vector<16x8xf32> -> vector<16x8xf32>
    %c0_6 = arith.constant 0 : index
    %c0_7 = arith.constant 0 : index
    %14 = vector.load %arg4[%c0_6, %c0_7] : memref<16x8xf32, #tpu.memory_space<vmem>>, vector<16x8xf32>
    tpu.vector_store %arg4[%c0_6, %c0_7], %13 {strides = array<i32>} : memref<16x8xf32, #tpu.memory_space<vmem>>, vector<16x8xf32>,
    return
  }
  func.func @transform_0(%arg0: i32) -> (i32, i32) {
    %c0_i32 = arith.constant 0 : i32
    %c0_i32_0 = arith.constant 0 : i32
    return %arg0, %c0_i32 : i32, i32
  }
  func.func @transform_1(%arg0: i32) -> (i32, i32) {
    %c0_i32 = arith.constant 0 : i32
    %c0_i32_0 = arith.constant 0 : i32
    %c0_i32_1 = arith.constant 0 : i32
    return %c0_i32, %c0_i32_0 : i32, i32
  }
  func.func @transform_2(%arg0: i32) -> i32 {
    %c0_i32 = arith.constant 0 : i32
    %c0_i32_0 = arith.constant 0 : i32
    return %c0_i32 : i32
  }
  func.func @transform_3(%arg0: i32) -> (i32, i32) {
    %c0_i32 = arith.constant 0 : i32
    %c0_i32_0 = arith.constant 0 : i32
    return %arg0, %c0_i32 : i32, i32
  }
}

</mosaic_0001>

<llo_original>
// kernel: _forward.2
$region0: #{_forward.2}
  #allocation0 [shape = 'u32[]', space=smem, size = 0x4, offset = 0x4, fixed_abs, tag = 'smem constant byte address 0x4 - core index']
  #allocation1 [shape = 'u32[144,128]{1,0:T(1,128)}', space=vmem, size = 0x12000, scoped, tag = 'internal scratch']
  #allocation2 [shape = 'f32[1]{0:T(128)S(6)}', space=smem, size = 0x200, scoped, tag = 'scoped memory for _forward.2']
  %s0 = inlined_call_operand.vmem [shape: f32[75,128], index: 0, kind: input, shape index: {}]
  %s1 = inlined_call_operand.vmem [shape: f32[128,4], index: 1, kind: input, shape index: {}]
  %s2 = inlined_call_operand.<no memory space> [shape: f32[1], index: 2, kind: input, shape index: {}]
  %s3 = inlined_call_operand.vmem [shape: f32[75,4], index: 3, kind: output, shape index: {}]
  %s4 = sld [smem:[#allocation0]]
  $region45: #{_forward.2} parent=0
    _
  %s6 = ssub.s32 1, %s4
  %s7 = scalar_select 0, %s6, %s4
  %8 = sst [smem:[#allocation2]] %s2
  loop: start=0, step=1, limit=4
  $region2: #{_forward.2} parent=0 // loop_pre_header
    _
  $region3: #{_forward.2} parent=0 // loop_header
    %s10 = sphi 0, %s14
    %p11 = scmp.ge.s32.totalorder %s10, 4
    %s20 = sphi 0, %s22
    %s23 = sphi 0, %s20
    %s24 = sphi 0, %s23
    %s40 = sphi 0, %s24
    %s44 = sphi 0, %s44
    %s46 = sphi 0, %s44
    %s47 = sphi 0, %s46
    %s61 = sphi 0, %s47
    %s65 = sphi 0, %s65
    %s67 = sphi 0, %s65
    %s68 = sphi 0, %s67
    %s82 = sphi 0, %s68
    %s88 = sphi 0, %s90
    %s91 = sphi 0, %s88
    %s92 = sphi 0, %s91
    %s108 = sphi 0, %s92
  $region4: #{_forward.2} parent=0 // loop_header_branch
    %13 = sbr.rel (%p11) target = $region8
  $region5: #{_forward.2} parent=0 // loop_body
    %s15 = ssub.s32 %s10, 1
    %s16 = ssub.s32 %s10, 2
    %s17 = sadd.s32 %s10, 1
    %s18 = ssub.s32 %s10, %s17
    %p19 = scmp.eq.s32.totalorder %s18, 0
    %s21 = sadd.s32 %s20, 1
    %s22 = scalar_select %p19, %s20, %s21
    %p25 = pneg %p19
    %p26 = scmp.eq.s32.totalorder %s10, 1
    %p27 = por %p25, %p26
    %p28 = scmp.ne.s32.totalorder %s20, %s23
    %p29 = scmp.eq.s32.totalorder %s10, 0
    %p30 = por %p28, %p29
    %p31 = scmp.ne.s32.totalorder %s20, %s23
    %p32 = scmp.eq.s32.totalorder %s15, 1
    %p33 = por %p31, %p32
    %p34 = scmp.ne.s32.totalorder %s23, %s24
    %p35 = scmp.eq.s32.totalorder %s15, 0
    %p36 = por %p34, %p35
    %p37 = scmp.ne.s32.totalorder %s23, %s24
    %p38 = scmp.eq.s32.totalorder %s16, 1
    %p39 = por %p37, %p38
    %p41 = scmp.ne.s32.totalorder %s24, %s40
    %p42 = scmp.eq.s32.totalorder %s16, 0
    %p43 = por %p41, %p42
    %s45 = sadd.s32 %s44, 1
    %p48 = scmp.eq.s32.totalorder %s10, 1
    %p49 = scmp.ne.s32.totalorder %s44, %s46
    %p50 = scmp.eq.s32.totalorder %s10, 0
    %p51 = por %p49, %p50
    %p52 = scmp.ne.s32.totalorder %s44, %s46
    %p53 = scmp.eq.s32.totalorder %s15, 1
    %p54 = por %p52, %p53
    %p55 = scmp.ne.s32.totalorder %s46, %s47
    %p56 = scmp.eq.s32.totalorder %s15, 0
    %p57 = por %p55, %p56
    %p58 = scmp.ne.s32.totalorder %s46, %s47
    %p59 = scmp.eq.s32.totalorder %s16, 1
    %p60 = por %p58, %p59
    %p62 = scmp.ne.s32.totalorder %s47, %s61
    %p63 = scmp.eq.s32.totalorder %s16, 0
    %p64 = por %p62, %p63
    %s66 = sadd.s32 %s65, 1
    %p69 = scmp.eq.s32.totalorder %s10, 1
    %p70 = scmp.ne.s32.totalorder %s65, %s67
    %p71 = scmp.eq.s32.totalorder %s10, 0
    %p72 = por %p70, %p71
    %p73 = scmp.ne.s32.totalorder %s65, %s67
    %p74 = scmp.eq.s32.totalorder %s15, 1
    %p75 = por %p73, %p74
    %p76 = scmp.ne.s32.totalorder %s67, %s68
    %p77 = scmp.eq.s32.totalorder %s15, 0
    %p78 = por %p76, %p77
    %p79 = scmp.ne.s32.totalorder %s67, %s68
    %p80 = scmp.eq.s32.totalorder %s16, 1
    %p81 = por %p79, %p80
    %p83 = scmp.ne.s32.totalorder %s68, %s82
    %p84 = scmp.eq.s32.totalorder %s16, 0
    %p85 = por %p83, %p84
    %s86 = ssub.s32 %s10, %s17
    %p87 = scmp.eq.s32.totalorder %s86, 0
    %s89 = sadd.s32 %s88, 1
    %s90 = scalar_select %p87, %s88, %s89
    %p93 = pneg %p87
    %p94 = scmp.eq.s32.totalorder %s10, 1
    %p95 = por %p93, %p94
    %p96 = scmp.ne.s32.totalorder %s88, %s91
    %p97 = scmp.eq.s32.totalorder %s10, 0
    %p98 = por %p96, %p97
    %p99 = scmp.ne.s32.totalorder %s88, %s91
    %p100 = scmp.eq.s32.totalorder %s15, 1
    %p101 = por %p99, %p100
    %p102 = scmp.ne.s32.totalorder %s91, %s92
    %p103 = scmp.eq.s32.totalorder %s15, 0
    %p104 = por %p102, %p103
    %p105 = scmp.ne.s32.totalorder %s91, %s92
    %p106 = scmp.eq.s32.totalorder %s16, 1
    %p107 = por %p105, %p106
    %p109 = scmp.ne.s32.totalorder %s92, %s108
    %p110 = scmp.eq.s32.totalorder %s16, 0
    %p111 = por %p109, %p110
    %p112 = scmp.le.s32.totalorder 1, %s10
    %p113 = scmp.lt.s32.totalorder %s10, 3
    %p114 = pnand %p112, %p113
    %p115 = pneg %p114
    // Predicated region
    $region9: #{_forward.2} parent=5 // pred_check
      _
    $region10: #{_forward.2} parent=5 // pred_check_branch
      %117 = sbr.rel (%p114) target = $region12
    $region11: #{_forward.2} parent=5 // pred_region
      %s118 = ssub.s32 %s10, 1
      // Predicated region
      $region13: #{_forward.2} parent=11 // pred_check
        %p119 = pneg %p57
      $region14: #{_forward.2} parent=11 // pred_check_branch
        %121 = sbr.rel (%p119) target = $region16
      $region15: #{_forward.2} parent=11 // pred_region
        _
      $region16: #{_forward.2} parent=11 // pred_fallthru
        _
      // Predicated region
      $region17: #{_forward.2} parent=11 // pred_check
        %p122 = pneg %p78
      $region18: #{_forward.2} parent=11 // pred_check_branch
        %124 = sbr.rel (%p122) target = $region20
      $region19: #{_forward.2} parent=11 // pred_region
        _
      $region20: #{_forward.2} parent=11 // pred_fallthru
        _
    $region12: #{_forward.2} parent=5 // pred_fallthru
      _
    %p125 = scmp.lt.s32.totalorder %s10, 2
    // Predicated region
    $region21: #{_forward.2} parent=5 // pred_check
      %p126 = pneg %p125
    $region22: #{_forward.2} parent=5 // pred_check_branch
      %128 = sbr.rel (%p126) target = $region24
    $region23: #{_forward.2} parent=5 // pred_region
      // Predicated region
      $region25: #{_forward.2} parent=23 // pred_check
        %p129 = pneg %p30
      $region26: #{_forward.2} parent=23 // pred_check_branch
        %131 = sbr.rel (%p129) target = $region28
      $region27: #{_forward.2} parent=23 // pred_region
        %s132 = smul.u32 5, %s10
        %p133 = scmp.lt.s32.totalorder %s132, 9
        %s134 = scalar_select %p133, %s132, 9
        %s135 = smul.addr %s134, 8
        %s136 = scalar_lea.vmem %s0, %s135
        %s137 = smul.u32 5, %s10
      $region28: #{_forward.2} parent=23 // pred_fallthru
        _
    $region24: #{_forward.2} parent=5 // pred_fallthru
      _
    %p138 = scmp.le.s32.totalorder 1, %s10
    %p139 = scmp.lt.s32.totalorder %s10, 3
    %p140 = pnand %p138, %p139
    %p141 = pneg %p140
    // Predicated region
    $region29: #{_forward.2} parent=5 // pred_check
      _
    $region30: #{_forward.2} parent=5 // pred_check_branch
      %143 = sbr.rel (%p140) target = $region32
    $region31: #{_forward.2} parent=5 // pred_region
      %s144 = ssub.s32 %s10, 1
      %s145 = smul.u32 5, %s15
      %p146 = scmp.lt.s32.totalorder %s145, 9
      %s147 = scalar_select %p146, %s145, 9
      %s148 = smul.addr %s147, 8
      %s149 = scalar_lea.vmem %s0, %s148
      %p150 = pneg %p36
      %p151 = pneg %p33
      %p152 = pneg %p57
      %p153 = pneg %p54
      %p154 = pneg %p78
      %p155 = pneg %p75
      %p156 = pneg %p104
      %p157 = pneg %p101
      %s158 = smul.u32 5, %s15
      %p159 = scmp.lt.s32.totalorder %s158, 9
      %s160 = scalar_select %p159, %s158, 9
      %s161 = smul.addr %s160, 8
      %s162 = scalar_lea.vmem %s3, %s161
      %s163 = smul.u32 5, %s15
      %p164 = scmp.lt.s32.totalorder %s163, 9
      %s165 = scalar_select %p164, %s163, 9
      %s166 = smul.addr %s165, 8
      %s167 = scalar_lea.vmem %s0, %s166
      %s168 = smul.u32 5, %s15
      %s169 = smul.u32 5, %s15
      %p170 = scmp.lt.s32.totalorder %s169, 9
      %s171 = scalar_select %p170, %s169, 9
      %s172 = smul.addr %s171, 8
      %s173 = scalar_lea.vmem %s3, %s172
      %s174 = smul.u32 5, %s15
      %v176 = vld [vmem:[%s167] sm:$0xff]
      %v177 = vld [vmem:[%s167 + $0x8] sm:$0xff]
      %v178 = vld [vmem:[%s167 + $0x10] sm:$0xff]
      %v179 = vld [vmem:[%s167 + $0x18] sm:$0xff]
      %v180 = vld [vmem:[%s167 + $0x20] sm:$0xff]
      %v181 = vpack.c.bf16 %v177, %v176
      %v182 = vpack.c.bf16 %v179, %v178
      %v183 = vpack.c.bf16 %v180, %v180
      %v184 = vld [vmem:[%s1] sm:$0xff]
      %v185 = vld [vmem:[%s1 + $0x8] sm:$0xff]
      %v186 = vld [vmem:[%s1 + $0x10] sm:$0xff]
      %v187 = vld [vmem:[%s1 + $0x18] sm:$0xff]
      %v188 = vld [vmem:[%s1 + $0x20] sm:$0xff]
      %v189 = vld [vmem:[%s1 + $0x28] sm:$0xff]
      %v190 = vld [vmem:[%s1 + $0x30] sm:$0xff]
      %v191 = vld [vmem:[%s1 + $0x38] sm:$0xff]
      %v192 = vld [vmem:[%s1 + $0x40] sm:$0xff]
      %v193 = vld [vmem:[%s1 + $0x48] sm:$0xff]
      %v194 = vld [vmem:[%s1 + $0x50] sm:$0xff]
      %v195 = vld [vmem:[%s1 + $0x58] sm:$0xff]
      %v196 = vld [vmem:[%s1 + $0x60] sm:$0xff]
      %v197 = vld [vmem:[%s1 + $0x68] sm:$0xff]
      %v198 = vld [vmem:[%s1 + $0x70] sm:$0xff]
      %v199 = vld [vmem:[%s1 + $0x78] sm:$0xff]
      %v200 = vpack.c.bf16 %v185, %v184
      %v201 = vpack.c.bf16 %v187, %v186
      %v202 = vpack.c.bf16 %v189, %v188
      %v203 = vpack.c.bf16 %v191, %v190
      %v204 = vpack.c.bf16 %v193, %v192
      %v205 = vpack.c.bf16 %v195, %v194
      %v206 = vpack.c.bf16 %v197, %v196
      %v207 = vpack.c.bf16 %v199, %v198
      %s208 = sld [smem:[#allocation2]]
      %v209 = vstv %s208
      %210 = vmatprep.subr.bf16.mxu0 0
      %211 = vmatpush1.bf16.msra.mxu0 %v200
      %212 = vmatprep.subr.bf16.mxu0 0
      %213 = vmatpush1.bf16.msra.mxu0 %v201
      %214 = vmatprep.subr.bf16.mxu0 0
      %215 = vmatpush1.bf16.msra.mxu0 %v202
      %216 = vmatprep.subr.bf16.mxu0 0
      %217 = vmatpush1.bf16.msra.mxu0 %v203
      %218 = vmatprep.subr.bf16.mxu0 0
      %219 = vmatpush1.bf16.msra.mxu0 %v204
      %220 = vmatprep.subr.bf16.mxu0 0
      %221 = vmatpush1.bf16.msra.mxu0 %v205
      %222 = vmatprep.subr.bf16.mxu0 0
      %223 = vmatpush1.bf16.msra.mxu0 %v206
      %224 = vmatprep.subr.bf16.mxu0 0
      %225 = vmatpush1.bf16.msra.mxu0 %v207
      %226 = vmatprep.subr.bf16.mxu0 0
      %227 = vmatpush1.bf16.msra.mxu0 0
      %228 = vmatprep.subr.bf16.mxu0 0
      %229 = vmatpush1.bf16.msra.mxu0 0
      %230 = vmatprep.subr.bf16.mxu0 0
      %231 = vmatpush1.bf16.msra.mxu0 0
      %232 = vmatprep.subr.bf16.mxu0 0
      %233 = vmatpush1.bf16.msra.mxu0 0
      %234 = vmatprep.subr.bf16.mxu0 0
      %235 = vmatpush1.bf16.msra.mxu0 0
      %236 = vmatprep.subr.bf16.mxu0 0
      %237 = vmatpush1.bf16.msra.mxu0 0
      %238 = vmatprep.subr.bf16.mxu0 0
      %239 = vmatpush1.bf16.msra.mxu0 0
      %240 = vmatprep.subr.bf16.mxu0 0
      %241 = vmatpush1.bf16.msra.mxu0 0
      %242 = vmatprep.mubr.bf16.mxu0 0
      %243 = vmatmul.mubr.bf16.gmra.mrb[0].mxu0 %v181
      %v244 = vpop.f32.mrb[0].mxu0
      %v245 = vadd.f32 %v209, %v244
      %v246 = vpop.f32.mrb[0].mxu0
      %v247 = vpop.f32.mrb[0].mxu0
      %v248 = vadd.f32 %v209, %v247
      %v249 = vpop.f32.mrb[0].mxu0
      %250 = vmatprep.mubr.bf16.mxu0 0
      %251 = vmatmul.mubr.bf16.gmra.mrb[0].mxu0 %v182
      %v252 = vpop.f32.mrb[0].mxu0
      %v253 = vadd.f32 %v209, %v252
      %v254 = vpop.f32.mrb[0].mxu0
      %v255 = vpop.f32.mrb[0].mxu0
      %v256 = vadd.f32 %v209, %v255
      %v257 = vpop.f32.mrb[0].mxu0
      %258 = vmatprep.mubr.bf16.mxu0 0
      %259 = vmatmul.mubr.bf16.gmra.mrb[0].mxu0 %v183
      %v260 = vpop.f32.mrb[0].mxu0
      %v261 = vadd.f32 %v209, %v260
      %v262 = vpop.f32.mrb[0].mxu0
      %v263 = vpop.f32.mrb[0].mxu0
      %v264 = vpop.f32.mrb[0].mxu0
      %265 = vdwg.mxu0
      %v266 = vsub.f32 0.0, %v245
      %v267 = vsub.f32 0.0, %v248
      %v268 = vsub.f32 0.0, %v253
      %v269 = vsub.f32 0.0, %v256
      %v270 = vsub.f32 0.0, %v261
      %v271 = vmul.f32 %v266, 1.442695
      %v272 = vpow.pop %v271
      %v273 = vmul.f32 %v267, 1.442695
      %v274 = vpow.pop %v273
      %v275 = vmul.f32 %v268, 1.442695
      %v276 = vpow.pop %v275
      %v277 = vmul.f32 %v269, 1.442695
      %v278 = vpow.pop %v277
      %v279 = vmul.f32 %v270, 1.442695
      %v280 = vpow.pop %v279
      %v281 = vadd.f32 %v272, 1.0
      %v282 = vadd.f32 %v274, 1.0
      %v283 = vadd.f32 %v276, 1.0
      %v284 = vadd.f32 %v278, 1.0
      %v285 = vadd.f32 %v280, 1.0
      %v286 = vrcp.pop %v281
      %v287 = vrcp.pop %v282
      %v288 = vrcp.pop %v283
      %v289 = vrcp.pop %v284
      %v290 = vrcp.pop %v285
      %vm291 = vcmask 31744
      %292 = vst.msk [vmem:[%s173] sm:$0xff] %vm291, %v286
      %293 = vst.msk [vmem:[%s173 + $0x8] sm:$0xff] %vm291, %v287
      %294 = vst.msk [vmem:[%s173 + $0x10] sm:$0xff] %vm291, %v288
      %295 = vst.msk [vmem:[%s173 + $0x18] sm:$0xff] %vm291, %v289
      %296 = vst.msk [vmem:[%s173 + $0x20] sm:$0xff] %vm291, %v290
      %s297 = smul.u32 5, %s15
      %p298 = scmp.lt.s32.totalorder %s297, 9
      %s299 = scalar_select %p298, %s297, 9
      %s300 = smul.addr %s299, 8
      %s301 = scalar_lea.vmem %s3, %s300
      // Predicated region
      $region33: #{_forward.2} parent=31 // pred_check
        %p302 = pneg %p101
      $region34: #{_forward.2} parent=31 // pred_check_branch
        %304 = sbr.rel (%p302) target = $region36
      $region35: #{_forward.2} parent=31 // pred_region
        %s305 = smul.u32 5, %s15
      $region36: #{_forward.2} parent=31 // pred_fallthru
        _
    $region32: #{_forward.2} parent=5 // pred_fallthru
      _
    %p306 = scmp.le.s32.totalorder 2, %s10
    // Predicated region
    $region37: #{_forward.2} parent=5 // pred_check
      %p307 = pneg %p306
    $region38: #{_forward.2} parent=5 // pred_check_branch
      %309 = sbr.rel (%p307) target = $region40
    $region39: #{_forward.2} parent=5 // pred_region
      %s310 = ssub.s32 %s10, 2
      // Predicated region
      $region41: #{_forward.2} parent=39 // pred_check
        %p311 = pneg %p107
      $region42: #{_forward.2} parent=39 // pred_check_branch
        %313 = sbr.rel (%p311) target = $region44
      $region43: #{_forward.2} parent=39 // pred_region
        %s314 = smul.u32 5, %s16
        %p315 = scmp.lt.s32.totalorder %s314, 9
        %s316 = scalar_select %p315, %s314, 9
        %s317 = smul.addr %s316, 8
        %s318 = scalar_lea.vmem %s3, %s317
      $region44: #{_forward.2} parent=39 // pred_fallthru
        _
    $region40: #{_forward.2} parent=5 // pred_fallthru
      _
  $region6: #{_forward.2} parent=0 // loop_footer
    %s14 = sadd.s32 1, %s10
  $region7: #{_forward.2} parent=0 // loop_footer_branch
    %9 = sbr.rel target = $region3
  $region8: #{_forward.2} parent=0 // loop_exit
    _

// kernel: _forward.3
$region0: #{_forward.3}
  #allocation0 [shape = 'u32[]', space=smem, size = 0x4, offset = 0x4, fixed_abs, tag = 'smem constant byte address 0x4 - core index']
  #allocation1 [shape = 'u32[144,128]{1,0:T(1,128)}', space=vmem, size = 0x12000, scoped, tag = 'internal scratch']
  #allocation2 [shape = 'f32[1]{0:T(128)S(6)}', space=smem, size = 0x200, scoped, tag = 'scoped memory for _forward.3']
  %s0 = inlined_call_operand.vmem [shape: f32[25,128], index: 0, kind: input, shape index: {}]
  %s1 = inlined_call_operand.vmem [shape: f32[128,8], index: 1, kind: input, shape index: {}]
  %s2 = inlined_call_operand.<no memory space> [shape: f32[1], index: 2, kind: input, shape index: {}]
  %s3 = inlined_call_operand.vmem [shape: f32[25,8], index: 3, kind: output, shape index: {}]
  %s4 = sld [smem:[#allocation0]]
  $region45: #{_forward.3} parent=0
    _
  %s6 = ssub.s32 1, %s4
  %s7 = scalar_select 0, %s6, %s4
  %8 = sst [smem:[#allocation2]] %s2
  loop: start=0, step=1, limit=4
  $region2: #{_forward.3} parent=0 // loop_pre_header
    _
  $region3: #{_forward.3} parent=0 // loop_header
    %s10 = sphi 0, %s14
    %p11 = scmp.ge.s32.totalorder %s10, 4
    %s20 = sphi 0, %s22
    %s23 = sphi 0, %s20
    %s24 = sphi 0, %s23
    %s40 = sphi 0, %s24
    %s44 = sphi 0, %s44
    %s46 = sphi 0, %s44
    %s47 = sphi 0, %s46
    %s61 = sphi 0, %s47
    %s65 = sphi 0, %s65
    %s67 = sphi 0, %s65
    %s68 = sphi 0, %s67
    %s82 = sphi 0, %s68
    %s88 = sphi 0, %s90
    %s91 = sphi 0, %s88
    %s92 = sphi 0, %s91
    %s108 = sphi 0, %s92
  $region4: #{_forward.3} parent=0 // loop_header_branch
    %13 = sbr.rel (%p11) target = $region8
  $region5: #{_forward.3} parent=0 // loop_body
    %s15 = ssub.s32 %s10, 1
    %s16 = ssub.s32 %s10, 2
    %s17 = sadd.s32 %s10, 1
    %s18 = ssub.s32 %s10, %s17
    %p19 = scmp.eq.s32.totalorder %s18, 0
    %s21 = sadd.s32 %s20, 1
    %s22 = scalar_select %p19, %s20, %s21
    %p25 = pneg %p19
    %p26 = scmp.eq.s32.totalorder %s10, 1
    %p27 = por %p25, %p26
    %p28 = scmp.ne.s32.totalorder %s20, %s23
    %p29 = scmp.eq.s32.totalorder %s10, 0
    %p30 = por %p28, %p29
    %p31 = scmp.ne.s32.totalorder %s20, %s23
    %p32 = scmp.eq.s32.totalorder %s15, 1
    %p33 = por %p31, %p32
    %p34 = scmp.ne.s32.totalorder %s23, %s24
    %p35 = scmp.eq.s32.totalorder %s15, 0
    %p36 = por %p34, %p35
    %p37 = scmp.ne.s32.totalorder %s23, %s24
    %p38 = scmp.eq.s32.totalorder %s16, 1
    %p39 = por %p37, %p38
    %p41 = scmp.ne.s32.totalorder %s24, %s40
    %p42 = scmp.eq.s32.totalorder %s16, 0
    %p43 = por %p41, %p42
    %s45 = sadd.s32 %s44, 1
    %p48 = scmp.eq.s32.totalorder %s10, 1
    %p49 = scmp.ne.s32.totalorder %s44, %s46
    %p50 = scmp.eq.s32.totalorder %s10, 0
    %p51 = por %p49, %p50
    %p52 = scmp.ne.s32.totalorder %s44, %s46
    %p53 = scmp.eq.s32.totalorder %s15, 1
    %p54 = por %p52, %p53
    %p55 = scmp.ne.s32.totalorder %s46, %s47
    %p56 = scmp.eq.s32.totalorder %s15, 0
    %p57 = por %p55, %p56
    %p58 = scmp.ne.s32.totalorder %s46, %s47
    %p59 = scmp.eq.s32.totalorder %s16, 1
    %p60 = por %p58, %p59
    %p62 = scmp.ne.s32.totalorder %s47, %s61
    %p63 = scmp.eq.s32.totalorder %s16, 0
    %p64 = por %p62, %p63
    %s66 = sadd.s32 %s65, 1
    %p69 = scmp.eq.s32.totalorder %s10, 1
    %p70 = scmp.ne.s32.totalorder %s65, %s67
    %p71 = scmp.eq.s32.totalorder %s10, 0
    %p72 = por %p70, %p71
    %p73 = scmp.ne.s32.totalorder %s65, %s67
    %p74 = scmp.eq.s32.totalorder %s15, 1
    %p75 = por %p73, %p74
    %p76 = scmp.ne.s32.totalorder %s67, %s68
    %p77 = scmp.eq.s32.totalorder %s15, 0
    %p78 = por %p76, %p77
    %p79 = scmp.ne.s32.totalorder %s67, %s68
    %p80 = scmp.eq.s32.totalorder %s16, 1
    %p81 = por %p79, %p80
    %p83 = scmp.ne.s32.totalorder %s68, %s82
    %p84 = scmp.eq.s32.totalorder %s16, 0
    %p85 = por %p83, %p84
    %s86 = ssub.s32 %s10, %s17
    %p87 = scmp.eq.s32.totalorder %s86, 0
    %s89 = sadd.s32 %s88, 1
    %s90 = scalar_select %p87, %s88, %s89
    %p93 = pneg %p87
    %p94 = scmp.eq.s32.totalorder %s10, 1
    %p95 = por %p93, %p94
    %p96 = scmp.ne.s32.totalorder %s88, %s91
    %p97 = scmp.eq.s32.totalorder %s10, 0
    %p98 = por %p96, %p97
    %p99 = scmp.ne.s32.totalorder %s88, %s91
    %p100 = scmp.eq.s32.totalorder %s15, 1
    %p101 = por %p99, %p100
    %p102 = scmp.ne.s32.totalorder %s91, %s92
    %p103 = scmp.eq.s32.totalorder %s15, 0
    %p104 = por %p102, %p103
    %p105 = scmp.ne.s32.totalorder %s91, %s92
    %p106 = scmp.eq.s32.totalorder %s16, 1
    %p107 = por %p105, %p106
    %p109 = scmp.ne.s32.totalorder %s92, %s108
    %p110 = scmp.eq.s32.totalorder %s16, 0
    %p111 = por %p109, %p110
    %p112 = scmp.le.s32.totalorder 1, %s10
    %p113 = scmp.lt.s32.totalorder %s10, 3
    %p114 = pnand %p112, %p113
    %p115 = pneg %p114
    // Predicated region
    $region9: #{_forward.3} parent=5 // pred_check
      _
    $region10: #{_forward.3} parent=5 // pred_check_branch
      %117 = sbr.rel (%p114) target = $region12
    $region11: #{_forward.3} parent=5 // pred_region
      %s118 = ssub.s32 %s10, 1
      // Predicated region
      $region13: #{_forward.3} parent=11 // pred_check
        %p119 = pneg %p57
      $region14: #{_forward.3} parent=11 // pred_check_branch
        %121 = sbr.rel (%p119) target = $region16
      $region15: #{_forward.3} parent=11 // pred_region
        _
      $region16: #{_forward.3} parent=11 // pred_fallthru
        _
      // Predicated region
      $region17: #{_forward.3} parent=11 // pred_check
        %p122 = pneg %p78
      $region18: #{_forward.3} parent=11 // pred_check_branch
        %124 = sbr.rel (%p122) target = $region20
      $region19: #{_forward.3} parent=11 // pred_region
        _
      $region20: #{_forward.3} parent=11 // pred_fallthru
        _
    $region12: #{_forward.3} parent=5 // pred_fallthru
      _
    %p125 = scmp.lt.s32.totalorder %s10, 2
    // Predicated region
    $region21: #{_forward.3} parent=5 // pred_check
      %p126 = pneg %p125
    $region22: #{_forward.3} parent=5 // pred_check_branch
      %128 = sbr.rel (%p126) target = $region24
    $region23: #{_forward.3} parent=5 // pred_region
      // Predicated region
      $region25: #{_forward.3} parent=23 // pred_check
        %p129 = pneg %p30
      $region26: #{_forward.3} parent=23 // pred_check_branch
        %131 = sbr.rel (%p129) target = $region28
      $region27: #{_forward.3} parent=23 // pred_region
        %s132 = smul.u32 2, %s10
        %p133 = scmp.lt.s32.totalorder %s132, 3
        %s134 = scalar_select %p133, %s132, 3
        %s135 = smul.addr %s134, 8
        %s136 = scalar_lea.vmem %s0, %s135
        %s137 = smul.u32 2, %s10
      $region28: #{_forward.3} parent=23 // pred_fallthru
        _
    $region24: #{_forward.3} parent=5 // pred_fallthru
      _
    %p138 = scmp.le.s32.totalorder 1, %s10
    %p139 = scmp.lt.s32.totalorder %s10, 3
    %p140 = pnand %p138, %p139
    %p141 = pneg %p140
    // Predicated region
    $region29: #{_forward.3} parent=5 // pred_check
      _
    $region30: #{_forward.3} parent=5 // pred_check_branch
      %143 = sbr.rel (%p140) target = $region32
    $region31: #{_forward.3} parent=5 // pred_region
      %s144 = ssub.s32 %s10, 1
      %s145 = smul.u32 2, %s15
      %p146 = scmp.lt.s32.totalorder %s145, 3
      %s147 = scalar_select %p146, %s145, 3
      %s148 = smul.addr %s147, 8
      %s149 = scalar_lea.vmem %s0, %s148
      %p150 = pneg %p36
      %p151 = pneg %p33
      %p152 = pneg %p57
      %p153 = pneg %p54
      %p154 = pneg %p78
      %p155 = pneg %p75
      %p156 = pneg %p104
      %p157 = pneg %p101
      %s158 = smul.u32 2, %s15
      %p159 = scmp.lt.s32.totalorder %s158, 3
      %s160 = scalar_select %p159, %s158, 3
      %s161 = smul.addr %s160, 8
      %s162 = scalar_lea.vmem %s3, %s161
      %s163 = smul.u32 2, %s15
      %p164 = scmp.lt.s32.totalorder %s163, 3
      %s165 = scalar_select %p164, %s163, 3
      %s166 = smul.addr %s165, 8
      %s167 = scalar_lea.vmem %s0, %s166
      %s168 = smul.u32 2, %s15
      %s169 = smul.u32 2, %s15
      %p170 = scmp.lt.s32.totalorder %s169, 3
      %s171 = scalar_select %p170, %s169, 3
      %s172 = smul.addr %s171, 8
      %s173 = scalar_lea.vmem %s3, %s172
      %s174 = smul.u32 2, %s15
      %v176 = vld [vmem:[%s167] sm:$0xff]
      %v177 = vld [vmem:[%s167 + $0x8] sm:$0xff]
      %v178 = vpack.c.bf16 %v177, %v176
      %v179 = vld [vmem:[%s1] sm:$0xff]
      %v180 = vld [vmem:[%s1 + $0x8] sm:$0xff]
      %v181 = vld [vmem:[%s1 + $0x10] sm:$0xff]
      %v182 = vld [vmem:[%s1 + $0x18] sm:$0xff]
      %v183 = vld [vmem:[%s1 + $0x20] sm:$0xff]
      %v184 = vld [vmem:[%s1 + $0x28] sm:$0xff]
      %v185 = vld [vmem:[%s1 + $0x30] sm:$0xff]
      %v186 = vld [vmem:[%s1 + $0x38] sm:$0xff]
      %v187 = vld [vmem:[%s1 + $0x40] sm:$0xff]
      %v188 = vld [vmem:[%s1 + $0x48] sm:$0xff]
      %v189 = vld [vmem:[%s1 + $0x50] sm:$0xff]
      %v190 = vld [vmem:[%s1 + $0x58] sm:$0xff]
      %v191 = vld [vmem:[%s1 + $0x60] sm:$0xff]
      %v192 = vld [vmem:[%s1 + $0x68] sm:$0xff]
      %v193 = vld [vmem:[%s1 + $0x70] sm:$0xff]
      %v194 = vld [vmem:[%s1 + $0x78] sm:$0xff]
      %v195 = vpack.c.bf16 %v180, %v179
      %v196 = vpack.c.bf16 %v182, %v181
      %v197 = vpack.c.bf16 %v184, %v183
      %v198 = vpack.c.bf16 %v186, %v185
      %v199 = vpack.c.bf16 %v188, %v187
      %v200 = vpack.c.bf16 %v190, %v189
      %v201 = vpack.c.bf16 %v192, %v191
      %v202 = vpack.c.bf16 %v194, %v193
      %s203 = sld [smem:[#allocation2]]
      %v204 = vstv %s203
      %205 = vmatprep.subr.bf16.mxu0 0
      %206 = vmatpush1.bf16.msra.mxu0 %v195
      %207 = vmatprep.subr.bf16.mxu0 0
      %208 = vmatpush1.bf16.msra.mxu0 %v196
      %209 = vmatprep.subr.bf16.mxu0 0
      %210 = vmatpush1.bf16.msra.mxu0 %v197
      %211 = vmatprep.subr.bf16.mxu0 0
      %212 = vmatpush1.bf16.msra.mxu0 %v198
      %213 = vmatprep.subr.bf16.mxu0 0
      %214 = vmatpush1.bf16.msra.mxu0 %v199
      %215 = vmatprep.subr.bf16.mxu0 0
      %216 = vmatpush1.bf16.msra.mxu0 %v200
      %217 = vmatprep.subr.bf16.mxu0 0
      %218 = vmatpush1.bf16.msra.mxu0 %v201
      %219 = vmatprep.subr.bf16.mxu0 0
      %220 = vmatpush1.bf16.msra.mxu0 %v202
      %221 = vmatprep.subr.bf16.mxu0 0
      %222 = vmatpush1.bf16.msra.mxu0 0
      %223 = vmatprep.subr.bf16.mxu0 0
      %224 = vmatpush1.bf16.msra.mxu0 0
      %225 = vmatprep.subr.bf16.mxu0 0
      %226 = vmatpush1.bf16.msra.mxu0 0
      %227 = vmatprep.subr.bf16.mxu0 0
      %228 = vmatpush1.bf16.msra.mxu0 0
      %229 = vmatprep.subr.bf16.mxu0 0
      %230 = vmatpush1.bf16.msra.mxu0 0
      %231 = vmatprep.subr.bf16.mxu0 0
      %232 = vmatpush1.bf16.msra.mxu0 0
      %233 = vmatprep.subr.bf16.mxu0 0
      %234 = vmatpush1.bf16.msra.mxu0 0
      %235 = vmatprep.subr.bf16.mxu0 0
      %236 = vmatpush1.bf16.msra.mxu0 0
      %237 = vmatprep.mubr.bf16.mxu0 0
      %238 = vmatmul.mubr.bf16.gmra.mrb[0].mxu0 %v178
      %v239 = vpop.f32.mrb[0].mxu0
      %v240 = vadd.f32 %v204, %v239
      %v241 = vpop.f32.mrb[0].mxu0
      %v242 = vpop.f32.mrb[0].mxu0
      %v243 = vadd.f32 %v204, %v242
      %v244 = vpop.f32.mrb[0].mxu0
      %245 = vdwg.mxu0
      %v246 = vsub.f32 0.0, %v240
      %v247 = vsub.f32 0.0, %v243
      %v248 = vmul.f32 %v246, 1.442695
      %v249 = vpow.pop %v248
      %v250 = vmul.f32 %v247, 1.442695
      %v251 = vpow.pop %v250
      %v252 = vadd.f32 %v249, 1.0
      %v253 = vadd.f32 %v251, 1.0
      %v254 = vrcp.pop %v252
      %v255 = vrcp.pop %v253
      %vm256 = vcmask 64512
      %257 = vst.msk [vmem:[%s173] sm:$0xff] %vm256, %v254
      %258 = vst.msk [vmem:[%s173 + $0x8] sm:$0xff] %vm256, %v255
      %s259 = smul.u32 2, %s15
      %p260 = scmp.lt.s32.totalorder %s259, 3
      %s261 = scalar_select %p260, %s259, 3
      %s262 = smul.addr %s261, 8
      %s263 = scalar_lea.vmem %s3, %s262
      // Predicated region
      $region33: #{_forward.3} parent=31 // pred_check
        %p264 = pneg %p101
      $region34: #{_forward.3} parent=31 // pred_check_branch
        %266 = sbr.rel (%p264) target = $region36
      $region35: #{_forward.3} parent=31 // pred_region
        %s267 = smul.u32 2, %s15
      $region36: #{_forward.3} parent=31 // pred_fallthru
        _
    $region32: #{_forward.3} parent=5 // pred_fallthru
      _
    %p268 = scmp.le.s32.totalorder 2, %s10
    // Predicated region
    $region37: #{_forward.3} parent=5 // pred_check
      %p269 = pneg %p268
    $region38: #{_forward.3} parent=5 // pred_check_branch
      %271 = sbr.rel (%p269) target = $region40
    $region39: #{_forward.3} parent=5 // pred_region
      %s272 = ssub.s32 %s10, 2
      // Predicated region
      $region41: #{_forward.3} parent=39 // pred_check
        %p273 = pneg %p107
      $region42: #{_forward.3} parent=39 // pred_check_branch
        %275 = sbr.rel (%p273) target = $region44
      $region43: #{_forward.3} parent=39 // pred_region
        %s276 = smul.u32 2, %s16
        %p277 = scmp.lt.s32.totalorder %s276, 3
        %s278 = scalar_select %p277, %s276, 3
        %s279 = smul.addr %s278, 8
        %s280 = scalar_lea.vmem %s3, %s279
      $region44: #{_forward.3} parent=39 // pred_fallthru
        _
    $region40: #{_forward.3} parent=5 // pred_fallthru
      _
  $region6: #{_forward.3} parent=0 // loop_footer
    %s14 = sadd.s32 1, %s10
  $region7: #{_forward.3} parent=0 // loop_footer_branch
    %9 = sbr.rel target = $region3
  $region8: #{_forward.3} parent=0 // loop_exit
    _

</llo_original>
